<compile_context>
chip_gen: v6e
topology: v6e:2x2x1
jax: 0.10.0
libtpu: 0.0.40
codegen_flags: <defaults>
</compile_context>

<pallas_src>
import functools

import jax
import jax.numpy as jnp
from jax.experimental import pallas as pl
from jax.experimental.pallas import tpu as pltpu


def _round_up(n, m):
    return ((n + m - 1) // m) * m


def lstm_fc_kernel(x_ref,     # (1, Ts*TB, I)  f32, time-major within the tile
                   wx_ref,    # (I, 4H)        gate order [i | f | o | g]
                   wh_ref,    # (H, 4H)
                   b_ref,     # (1, 4H)        f32
                   wfc_ref,   # (H, OP)        output lane-padded to 128
                   bfc_ref,   # (1, OP)        f32
                   out_ref,   # (TB, OP)       f32
                   h_scr,     # (TB, H)        f32 scratch, carried across chunks
                   c_scr,     # (TB, H)        f32 scratch, carried across chunks
                   *, S):
    TB, OP = out_ref.shape
    _, SB, I = x_ref.shape
    Ts = SB // TB                      # timesteps in this chunk
    H = h_scr.shape[1]
    mxu_dtype = wh_ref.dtype           # bf16 (default) or f32 debug path

    tc = pl.program_id(1)
    n_tc = pl.num_programs(1)

    @pl.when(tc == 0)
    def _():
        h_scr[...] = jnp.zeros_like(h_scr)
        c_scr[...] = jnp.zeros_like(c_scr)

    # Chunk input projection + bias: one (Ts*TB, I) x (I, 4H) matmul instead of
    # 4*Ts tiny ones inside the recurrence; bias broadcast happens once.
    x_all = x_ref[0].astype(mxu_dtype)                                # (Ts*TB, I)
    x_proj = (jnp.dot(x_all, wx_ref[...],
                      preferred_element_type=jnp.float32)
              + b_ref[...])                                           # (Ts*TB, 4H) f32

    wh = wh_ref[...]                   # loaded once, resident for all Ts steps

    h = h_scr[...]
    c = c_scr[...]

    # Static unroll over the chunk: only one dependent MXU matmul per timestep
    # remains on the critical path; LLO can interleave EUP/VPU work of
    # adjacent steps.  (Per-step binding unit at TB>=64 is the single EUP slot
    # running 5*TB*H sigmoid/tanh elements, not the MXU.)
    for lt in range(Ts):
        gates = x_proj[lt * TB:(lt + 1) * TB, :] + jnp.dot(
            h.astype(mxu_dtype), wh, preferred_element_type=jnp.float32)
        ifo = jax.nn.sigmoid(gates[:, :3 * H])     # [i | f | o] in one EUP launch
        g = jnp.tanh(gates[:, 3 * H:])
        i_g = ifo[:, 0 * H:1 * H]
        f_g = ifo[:, 1 * H:2 * H]
        o_g = ifo[:, 2 * H:3 * H]
        c_new = f_g * c + i_g * g
        h_new = o_g * jnp.tanh(c_new)
        if S % Ts != 0:
            # Ragged final chunk: skip updates for padded (zero) timesteps.
            valid = (tc * Ts + lt) < S
            c = jnp.where(valid, c_new, c)
            h = jnp.where(valid, h_new, h)
        else:
            c, h = c_new, h_new

    h_scr[...] = h
    c_scr[...] = c

    # Final fully-connected layer on the last hidden state; OP is a multiple
    # of 128 so the store is an unmasked, lane-dense vst.
    @pl.when(tc == n_tc - 1)
    def _():
        out_ref[...] = (jnp.dot(h.astype(mxu_dtype), wfc_ref[...],
                                preferred_element_type=jnp.float32)
                        + bfc_ref[...]).astype(out_ref.dtype)


def _vmem_limit_bytes(Ts, TB, I, H, H4, OP, mxu_itemsize):
    lane = 128
    x_tiles = 2 * Ts * TB * _round_up(I, lane) * 4        # double-buffered x chunk
    out_tile = 2 * TB * OP * 4
    scratch = 2 * TB * _round_up(H, lane) * 4              # h + c
    x_proj = Ts * TB * H4 * 4                              # per-chunk projection
    weights = 2 * (_round_up(I, 8) * H4 + _round_up(H, 8) * H4
                   + _round_up(H, 8) * OP) * mxu_itemsize
    biases = 2 * 8 * (H4 + OP) * 4
    est = x_tiles + out_tile + scratch + x_proj + weights + biases
    # 2x headroom + slack; floor at the smallest default scoped limit (16 MiB),
    # cap well under v5e/v6e physical (on v7x stay under 64 MiB physical).
    return int(min(max(2 * est + (2 << 20), 16 << 20), 96 << 20))


@functools.partial(jax.jit, static_argnames=("mxu_dtype",))
def neural_network_forward(x, params, mxu_dtype=jnp.bfloat16):
    """x: (batch, seq, input_size) f32. Returns (batch, output_dim) f32."""
    B, S, I = x.shape
    H = params["whi"].shape[0]
    O = params["wfc"].shape[1]
    H4 = 4 * H

    # Fuse the four gates: [i | f | o | g] so one sigmoid covers a contiguous
    # 3H slice and tanh the trailing H slice.
    wx_all = jnp.concatenate(
        [params["wxi"], params["wxf"], params["wxo"], params["wxg"]],
        axis=1).astype(mxu_dtype)                                   # (I, 4H)
    wh_all = jnp.concatenate(
        [params["whi"], params["whf"], params["who"], params["whg"]],
        axis=1).astype(mxu_dtype)                                   # (H, 4H)
    b_all = jnp.concatenate(
        [params["bi"], params["bf"], params["bo"], params["bg"]],
        axis=1)                                                     # (1, 4H) f32

    # Lane-dense output: pad the output dim up to a multiple of 128.
    OP = _round_up(O, 128)
    wfc = jnp.pad(params["wfc"], ((0, 0), (0, OP - O))).astype(mxu_dtype)
    bfc = jnp.pad(params["bfc"], ((0, 0), (0, OP - O)))

    # Sublane-pad the batch; one fat batch tile up to 128 rows (TB>128 would
    # spill: h/c/gates only use 32 of 128 lanes per vreg).
    BP = _round_up(B, 8)
    TB = min(BP, 128)
    BP = _round_up(BP, TB)
    nb = BP // TB

    # Time chunking: bounds VMEM to O(Ts*TB*4H) independent of S.
    Ts = min(S, 16)
    n_tc = pl.cdiv(S, Ts)
    S_pad = n_tc * Ts

    # Pre-tile x so the kernel never reshapes across tiled dims:
    # x_tiles[b, t*TB + j, :] == x[b*TB + j, t, :]  (batch/time zero-padded;
    # padded timesteps are masked off inside the kernel).
    x_sbi = jnp.transpose(x, (1, 0, 2))                             # (S, B, I)
    x_sbi = jnp.pad(x_sbi, ((0, S_pad - S), (0, BP - B), (0, 0)))   # (S_pad, BP, I)
    x_tiles = (x_sbi.reshape(S_pad, nb, TB, I)
               .transpose(1, 0, 2, 3)
               .reshape(nb, S_pad * TB, I))                         # (nb, S_pad*TB, I)

    kernel = functools.partial(lstm_fc_kernel, S=S)
    vmem_limit = _vmem_limit_bytes(Ts, TB, I, H, H4, OP,
                                   jnp.dtype(mxu_dtype).itemsize)

    out = pl.pallas_call(
        kernel,
        out_shape=jax.ShapeDtypeStruct((BP, OP), jnp.float32),
        grid_spec=pltpu.PrefetchScalarGridSpec(
            num_scalar_prefetch=0,
            grid=(nb, n_tc),
            in_specs=[
                pl.BlockSpec((1, Ts * TB, I), lambda b, t: (b, t, 0)),
                pl.BlockSpec((I, H4), lambda b, t: (0, 0)),
                pl.BlockSpec((H, H4), lambda b, t: (0, 0)),
                pl.BlockSpec((1, H4), lambda b, t: (0, 0)),
                pl.BlockSpec((H, OP), lambda b, t: (0, 0)),
                pl.BlockSpec((1, OP), lambda b, t: (0, 0)),
            ],
            out_specs=pl.BlockSpec((TB, OP), lambda b, t: (b, 0)),
            scratch_shapes=[
                pltpu.VMEM((TB, H), jnp.float32),   # h carried across chunks
                pltpu.VMEM((TB, H), jnp.float32),   # c carried across chunks
            ],
        ),
        compiler_params=pltpu.CompilerParams(
            dimension_semantics=("parallel", "arbitrary"),
            vmem_limit_bytes=vmem_limit),
    )(x_tiles, wx_all, wh_all, b_all, wfc, bfc)

    return out[:B, :O]


def init_params(key, input_size, hidden_size, output_dim):
    """Matches the PyTorch module's uniform(-stdv, stdv) init (math order)."""
    stdv = 1.0 / (hidden_size ** 0.5)
    names_shapes = [
        ("wxi", (input_size, hidden_size)), ("whi", (hidden_size, hidden_size)),
        ("bi", (1, hidden_size)),
        ("wxf", (input_size, hidden_size)), ("whf", (hidden_size, hidden_size)),
        ("bf", (1, hidden_size)),
        ("wxg", (input_size, hidden_size)), ("whg", (hidden_size, hidden_size)),
        ("bg", (1, hidden_size)),
        ("wxo", (input_size, hidden_size)), ("who", (hidden_size, hidden_size)),
        ("bo", (1, hidden_size)),
        ("wfc", (hidden_size, output_dim)), ("bfc", (1, output_dim)),
    ]
    params = {}
    for name, shape in names_shapes:
        key, sub = jax.random.split(key)
        params[name] = jax.random.uniform(
            sub, shape, jnp.float32, minval=-stdv, maxval=stdv)
    return params


def reference_forward(x, p):
    """Pure-JAX mirror of the PyTorch forward for validation."""
    B, S, I = x.shape
    H = p["whi"].shape[0]
    h = jnp.zeros((B, H), jnp.float32)
    c = jnp.zeros((B, H), jnp.float32)
    for t in range(S):
        xt = x[:, t, :]
        i_g = jax.nn.sigmoid(xt @ p["wxi"] + h @ p["whi"] + p["bi"])
        f_g = jax.nn.sigmoid(xt @ p["wxf"] + h @ p["whf"] + p["bf"])
        g_g = jnp.tanh(xt @ p["wxg"] + h @ p["whg"] + p["bg"])
        o_g = jax.nn.sigmoid(xt @ p["wxo"] + h @ p["who"] + p["bo"])
        c = f_g * c + i_g * g_g
        h = o_g * jnp.tanh(c)
    return h @ p["wfc"] + p["bfc"]


if __name__ == "__main__":
    batch, seq, input_size, hidden_size, output_dim = 2, 8, 4, 32, 1

    key = jax.random.PRNGKey(0)
    key, xkey = jax.random.split(key)
    x = jax.random.normal(xkey, (batch, seq, input_size), jnp.float32)
    params = init_params(key, input_size, hidden_size, output_dim)

    ref = reference_forward(x, params)

    # Default bf16 MXU-input path (f32 accumulation / gate math) -> loose tol.
    out_bf16 = jax.block_until_ready(neural_network_forward(x, params))
    assert out_bf16.shape == (batch, output_dim)
    assert jnp.allclose(out_bf16, ref, atol=5e-2, rtol=5e-2), (out_bf16, ref)

    # f32 debug path: near-exact check against the pure-JAX reference.
    out_f32 = jax.block_until_ready(
        neural_network_forward(x, params, mxu_dtype=jnp.float32))
    assert out_f32.shape == (batch, output_dim)
    assert jnp.allclose(out_f32, ref, atol=1e-5, rtol=1e-5), (out_f32, ref)

    # Second shape exercising multi-chunk time grid + ragged-chunk masking
    # (S=21 -> Ts=16, 2 chunks, 11 padded timesteps masked off).
    key, xkey2 = jax.random.split(key)
    x2 = jax.random.normal(xkey2, (10, 21, input_size), jnp.float32)
    ref2 = reference_forward(x2, params)
    out2_f32 = jax.block_until_ready(
        neural_network_forward(x2, params, mxu_dtype=jnp.float32))
    assert out2_f32.shape == (10, output_dim)
    assert jnp.allclose(out2_f32, ref2, atol=1e-4, rtol=1e-4), (out2_f32, ref2)
    out2_bf16 = jax.block_until_ready(neural_network_forward(x2, params))
    assert out2_bf16.shape == (10, output_dim)

    print("KERNEL_OK")
</pallas_src>

<mosaic_0001>
module attributes {stable_mosaic.version = 11 : i64} {
  func.func @lstm_fc_kernel(%arg0: i32, %arg1: i32, %arg2: memref<1x64x4xf32, #tpu.memory_space<vmem>>, %arg3: memref<4x128xbf16, #tpu.memory_space<vmem>>, %arg4: memref<32x128xbf16, #tpu.memory_space<vmem>>, %arg5: memref<1x128xf32, #tpu.memory_space<vmem>>, %arg6: memref<32x128xbf16, #tpu.memory_space<vmem>>, %arg7: memref<1x128xf32, #tpu.memory_space<vmem>>, %arg8: memref<8x128xf32, #tpu.memory_space<vmem>>, %arg9: memref<8x32xf32, #tpu.memory_space<vmem>>, %arg10: memref<8x32xf32, #tpu.memory_space<vmem>>) attributes {dimension_semantics = [#tpu.dimension_semantics<parallel>, #tpu.dimension_semantics<arbitrary>], iteration_bounds = array<i64: 1, 1>, scalar_prefetch = 0 : i64, scratch_operands = 2 : i64, tpu.core_type = #tpu.core_type<tc>, window_params = [{transform_indices = @transform_0, window_bounds = array<i64: 1, 64, 4>}, {pipeline_mode = #tpu.pipeline_mode<synchronous>, transform_indices = @transform_1, window_bounds = array<i64: 4, 128>}, {pipeline_mode = #tpu.pipeline_mode<synchronous>, transform_indices = @transform_2, window_bounds = array<i64: 32, 128>}, {pipeline_mode = #tpu.pipeline_mode<synchronous>, transform_indices = @transform_3, window_bounds = array<i64: 1, 128>}, {pipeline_mode = #tpu.pipeline_mode<synchronous>, transform_indices = @transform_4, window_bounds = array<i64: 32, 128>}, {pipeline_mode = #tpu.pipeline_mode<synchronous>, transform_indices = @transform_5, window_bounds = array<i64: 1, 128>}, {transform_indices = @transform_6, window_bounds = array<i64: 8, 128>}]} {
    %c0_i32 = arith.constant 0 : i32
    %0 = arith.cmpi eq, %arg1, %c0_i32 : i32
    %1 = arith.extui %0 : i1 to i32
    %c0_i32_0 = arith.constant 0 : i32
    %2 = arith.cmpi ne, %1, %c0_i32_0 : i32
    scf.if %2 {
      %cst_35 = arith.constant 0.000000e+00 : f32
      %179 = vector.broadcast %cst_35 : f32 to vector<8x32xf32>
      %c0_36 = arith.constant 0 : index
      %c0_37 = arith.constant 0 : index
      %180 = vector.load %arg9[%c0_36, %c0_37] : memref<8x32xf32, #tpu.memory_space<vmem>>, vector<8x32xf32>
      tpu.vector_store %arg9[%c0_36, %c0_37], %179 {strides = array<i32>} : memref<8x32xf32, #tpu.memory_space<vmem>>, vector<8x32xf32>,
      %cst_38 = arith.constant 0.000000e+00 : f32
      %181 = vector.broadcast %cst_38 : f32 to vector<8x32xf32>
      %c0_39 = arith.constant 0 : index
      %c0_40 = arith.constant 0 : index
      %182 = vector.load %arg10[%c0_39, %c0_40] : memref<8x32xf32, #tpu.memory_space<vmem>>, vector<8x32xf32>
      tpu.vector_store %arg10[%c0_39, %c0_40], %181 {strides = array<i32>} : memref<8x32xf32, #tpu.memory_space<vmem>>, vector<8x32xf32>,
    } else {
    }
    %c0 = arith.constant 0 : index
    %c0_1 = arith.constant 0 : index
    %c0_2 = arith.constant 0 : index
    %3 = vector.load %arg2[%c0, %c0_1, %c0_2] : memref<1x64x4xf32, #tpu.memory_space<vmem>>, vector<1x64x4xf32>
    %4 = vector.shape_cast %3 : vector<1x64x4xf32> to vector<64x4xf32>
    %5 = arith.truncf %4 : vector<64x4xf32> to vector<64x4xbf16>
    %c0_3 = arith.constant 0 : index
    %c0_4 = arith.constant 0 : index
    %6 = vector.load %arg3[%c0_3, %c0_4] : memref<4x128xbf16, #tpu.memory_space<vmem>>, vector<4x128xbf16>
    %cst = arith.constant dense<0.000000e+00> : vector<64x128xf32>
    %7 = tpu.matmul %5, %6, %cst {dimension_numbers = #tpu.dot_dimension_numbers<[1], [0], [0], [1], [0, 0, 1, 1], [], []>} : vector<64x4xbf16>, vector<4x128xbf16>, vector<64x128xf32> -> vector<64x128xf32>
    %c0_5 = arith.constant 0 : index
    %c0_6 = arith.constant 0 : index
    %8 = vector.load %arg5[%c0_5, %c0_6] : memref<1x128xf32, #tpu.memory_space<vmem>>, vector<1x128xf32>
    %9 = vector.broadcast %8 : vector<1x128xf32> to vector<64x128xf32>
    %10 = arith.addf %7, %9 : vector<64x128xf32>
    %c0_7 = arith.constant 0 : index
    %c0_8 = arith.constant 0 : index
    %11 = vector.load %arg4[%c0_7, %c0_8] : memref<32x128xbf16, #tpu.memory_space<vmem>>, vector<32x128xbf16>
    %c0_9 = arith.constant 0 : index
    %c0_10 = arith.constant 0 : index
    %12 = vector.load %arg9[%c0_9, %c0_10] : memref<8x32xf32, #tpu.memory_space<vmem>>, vector<8x32xf32>
    %c0_11 = arith.constant 0 : index
    %c0_12 = arith.constant 0 : index
    %13 = vector.load %arg10[%c0_11, %c0_12] : memref<8x32xf32, #tpu.memory_space<vmem>>, vector<8x32xf32>
    %14 = vector.extract_strided_slice %10 {offsets = [0, 0], sizes = [8, 128], strides = [1, 1]} : vector<64x128xf32> to vector<8x128xf32>
    %15 = arith.truncf %12 : vector<8x32xf32> to vector<8x32xbf16>
    %cst_13 = arith.constant dense<0.000000e+00> : vector<8x128xf32>
    %16 = tpu.matmul %15, %11, %cst_13 {dimension_numbers = #tpu.dot_dimension_numbers<[1], [0], [0], [1], [0, 0, 1, 1], [], []>} : vector<8x32xbf16>, vector<32x128xbf16>, vector<8x128xf32> -> vector<8x128xf32>
    %17 = arith.addf %14, %16 : vector<8x128xf32>
    %18 = vector.extract_strided_slice %17 {offsets = [0, 0], sizes = [8, 96], strides = [1, 1]} : vector<8x128xf32> to vector<8x96xf32>
    %19 = arith.negf %18 : vector<8x96xf32>
    %20 = math.exp %19 : vector<8x96xf32>
    %cst_14 = arith.constant 1.000000e+00 : f32
    %21 = vector.broadcast %cst_14 : f32 to vector<8x96xf32>
    %22 = arith.addf %21, %20 : vector<8x96xf32>
    %23 = arith.divf %21, %22 : vector<8x96xf32>
    %24 = vector.extract_strided_slice %17 {offsets = [0, 96], sizes = [8, 32], strides = [1, 1]} : vector<8x128xf32> to vector<8x32xf32>
    %25 = math.tanh %24 : vector<8x32xf32>
    %26 = vector.extract_strided_slice %23 {offsets = [0, 0], sizes = [8, 32], strides = [1, 1]} : vector<8x96xf32> to vector<8x32xf32>
    %27 = vector.extract_strided_slice %23 {offsets = [0, 32], sizes = [8, 32], strides = [1, 1]} : vector<8x96xf32> to vector<8x32xf32>
    %28 = vector.extract_strided_slice %23 {offsets = [0, 64], sizes = [8, 32], strides = [1, 1]} : vector<8x96xf32> to vector<8x32xf32>
    %29 = arith.mulf %27, %13 : vector<8x32xf32>
    %30 = arith.mulf %26, %25 : vector<8x32xf32>
    %31 = arith.addf %29, %30 : vector<8x32xf32>
    %32 = math.tanh %31 : vector<8x32xf32>
    %33 = arith.mulf %28, %32 : vector<8x32xf32>
    %34 = vector.extract_strided_slice %10 {offsets = [8, 0], sizes = [8, 128], strides = [1, 1]} : vector<64x128xf32> to vector<8x128xf32>
    %35 = arith.truncf %33 : vector<8x32xf32> to vector<8x32xbf16>
    %cst_15 = arith.constant dense<0.000000e+00> : vector<8x128xf32>
    %36 = tpu.matmul %35, %11, %cst_15 {dimension_numbers = #tpu.dot_dimension_numbers<[1], [0], [0], [1], [0, 0, 1, 1], [], []>} : vector<8x32xbf16>, vector<32x128xbf16>, vector<8x128xf32> -> vector<8x128xf32>
    %37 = arith.addf %34, %36 : vector<8x128xf32>
    %38 = vector.extract_strided_slice %37 {offsets = [0, 0], sizes = [8, 96], strides = [1, 1]} : vector<8x128xf32> to vector<8x96xf32>
    %39 = arith.negf %38 : vector<8x96xf32>
    %40 = math.exp %39 : vector<8x96xf32>
    %cst_16 = arith.constant 1.000000e+00 : f32
    %41 = vector.broadcast %cst_16 : f32 to vector<8x96xf32>
    %42 = arith.addf %41, %40 : vector<8x96xf32>
    %43 = arith.divf %41, %42 : vector<8x96xf32>
    %44 = vector.extract_strided_slice %37 {offsets = [0, 96], sizes = [8, 32], strides = [1, 1]} : vector<8x128xf32> to vector<8x32xf32>
    %45 = math.tanh %44 : vector<8x32xf32>
    %46 = vector.extract_strided_slice %43 {offsets = [0, 0], sizes = [8, 32], strides = [1, 1]} : vector<8x96xf32> to vector<8x32xf32>
    %47 = vector.extract_strided_slice %43 {offsets = [0, 32], sizes = [8, 32], strides = [1, 1]} : vector<8x96xf32> to vector<8x32xf32>
    %48 = vector.extract_strided_slice %43 {offsets = [0, 64], sizes = [8, 32], strides = [1, 1]} : vector<8x96xf32> to vector<8x32xf32>
    %49 = arith.mulf %47, %31 : vector<8x32xf32>
    %50 = arith.mulf %46, %45 : vector<8x32xf32>
    %51 = arith.addf %49, %50 : vector<8x32xf32>
    %52 = math.tanh %51 : vector<8x32xf32>
    %53 = arith.mulf %48, %52 : vector<8x32xf32>
    %54 = vector.extract_strided_slice %10 {offsets = [16, 0], sizes = [8, 128], strides = [1, 1]} : vector<64x128xf32> to vector<8x128xf32>
    %55 = arith.truncf %53 : vector<8x32xf32> to vector<8x32xbf16>
    %cst_17 = arith.constant dense<0.000000e+00> : vector<8x128xf32>
    %56 = tpu.matmul %55, %11, %cst_17 {dimension_numbers = #tpu.dot_dimension_numbers<[1], [0], [0], [1], [0, 0, 1, 1], [], []>} : vector<8x32xbf16>, vector<32x128xbf16>, vector<8x128xf32> -> vector<8x128xf32>
    %57 = arith.addf %54, %56 : vector<8x128xf32>
    %58 = vector.extract_strided_slice %57 {offsets = [0, 0], sizes = [8, 96], strides = [1, 1]} : vector<8x128xf32> to vector<8x96xf32>
    %59 = arith.negf %58 : vector<8x96xf32>
    %60 = math.exp %59 : vector<8x96xf32>
    %cst_18 = arith.constant 1.000000e+00 : f32
    %61 = vector.broadcast %cst_18 : f32 to vector<8x96xf32>
    %62 = arith.addf %61, %60 : vector<8x96xf32>
    %63 = arith.divf %61, %62 : vector<8x96xf32>
    %64 = vector.extract_strided_slice %57 {offsets = [0, 96], sizes = [8, 32], strides = [1, 1]} : vector<8x128xf32> to vector<8x32xf32>
    %65 = math.tanh %64 : vector<8x32xf32>
    %66 = vector.extract_strided_slice %63 {offsets = [0, 0], sizes = [8, 32], strides = [1, 1]} : vector<8x96xf32> to vector<8x32xf32>
    %67 = vector.extract_strided_slice %63 {offsets = [0, 32], sizes = [8, 32], strides = [1, 1]} : vector<8x96xf32> to vector<8x32xf32>
    %68 = vector.extract_strided_slice %63 {offsets = [0, 64], sizes = [8, 32], strides = [1, 1]} : vector<8x96xf32> to vector<8x32xf32>
    %69 = arith.mulf %67, %51 : vector<8x32xf32>
    %70 = arith.mulf %66, %65 : vector<8x32xf32>
    %71 = arith.addf %69, %70 : vector<8x32xf32>
    %72 = math.tanh %71 : vector<8x32xf32>
    %73 = arith.mulf %68, %72 : vector<8x32xf32>
    %74 = vector.extract_strided_slice %10 {offsets = [24, 0], sizes = [8, 128], strides = [1, 1]} : vector<64x128xf32> to vector<8x128xf32>
    %75 = arith.truncf %73 : vector<8x32xf32> to vector<8x32xbf16>
    %cst_19 = arith.constant dense<0.000000e+00> : vector<8x128xf32>
    %76 = tpu.matmul %75, %11, %cst_19 {dimension_numbers = #tpu.dot_dimension_numbers<[1], [0], [0], [1], [0, 0, 1, 1], [], []>} : vector<8x32xbf16>, vector<32x128xbf16>, vector<8x128xf32> -> vector<8x128xf32>
    %77 = arith.addf %74, %76 : vector<8x128xf32>
    %78 = vector.extract_strided_slice %77 {offsets = [0, 0], sizes = [8, 96], strides = [1, 1]} : vector<8x128xf32> to vector<8x96xf32>
    %79 = arith.negf %78 : vector<8x96xf32>
    %80 = math.exp %79 : vector<8x96xf32>
    %cst_20 = arith.constant 1.000000e+00 : f32
    %81 = vector.broadcast %cst_20 : f32 to vector<8x96xf32>
    %82 = arith.addf %81, %80 : vector<8x96xf32>
    %83 = arith.divf %81, %82 : vector<8x96xf32>
    %84 = vector.extract_strided_slice %77 {offsets = [0, 96], sizes = [8, 32], strides = [1, 1]} : vector<8x128xf32> to vector<8x32xf32>
    %85 = math.tanh %84 : vector<8x32xf32>
    %86 = vector.extract_strided_slice %83 {offsets = [0, 0], sizes = [8, 32], strides = [1, 1]} : vector<8x96xf32> to vector<8x32xf32>
    %87 = vector.extract_strided_slice %83 {offsets = [0, 32], sizes = [8, 32], strides = [1, 1]} : vector<8x96xf32> to vector<8x32xf32>
    %88 = vector.extract_strided_slice %83 {offsets = [0, 64], sizes = [8, 32], strides = [1, 1]} : vector<8x96xf32> to vector<8x32xf32>
    %89 = arith.mulf %87, %71 : vector<8x32xf32>
    %90 = arith.mulf %86, %85 : vector<8x32xf32>
    %91 = arith.addf %89, %90 : vector<8x32xf32>
    %92 = math.tanh %91 : vector<8x32xf32>
    %93 = arith.mulf %88, %92 : vector<8x32xf32>
    %94 = vector.extract_strided_slice %10 {offsets = [32, 0], sizes = [8, 128], strides = [1, 1]} : vector<64x128xf32> to vector<8x128xf32>
    %95 = arith.truncf %93 : vector<8x32xf32> to vector<8x32xbf16>
    %cst_21 = arith.constant dense<0.000000e+00> : vector<8x128xf32>
    %96 = tpu.matmul %95, %11, %cst_21 {dimension_numbers = #tpu.dot_dimension_numbers<[1], [0], [0], [1], [0, 0, 1, 1], [], []>} : vector<8x32xbf16>, vector<32x128xbf16>, vector<8x128xf32> -> vector<8x128xf32>
    %97 = arith.addf %94, %96 : vector<8x128xf32>
    %98 = vector.extract_strided_slice %97 {offsets = [0, 0], sizes = [8, 96], strides = [1, 1]} : vector<8x128xf32> to vector<8x96xf32>
    %99 = arith.negf %98 : vector<8x96xf32>
    %100 = math.exp %99 : vector<8x96xf32>
    %cst_22 = arith.constant 1.000000e+00 : f32
    %101 = vector.broadcast %cst_22 : f32 to vector<8x96xf32>
    %102 = arith.addf %101, %100 : vector<8x96xf32>
    %103 = arith.divf %101, %102 : vector<8x96xf32>
    %104 = vector.extract_strided_slice %97 {offsets = [0, 96], sizes = [8, 32], strides = [1, 1]} : vector<8x128xf32> to vector<8x32xf32>
    %105 = math.tanh %104 : vector<8x32xf32>
    %106 = vector.extract_strided_slice %103 {offsets = [0, 0], sizes = [8, 32], strides = [1, 1]} : vector<8x96xf32> to vector<8x32xf32>
    %107 = vector.extract_strided_slice %103 {offsets = [0, 32], sizes = [8, 32], strides = [1, 1]} : vector<8x96xf32> to vector<8x32xf32>
    %108 = vector.extract_strided_slice %103 {offsets = [0, 64], sizes = [8, 32], strides = [1, 1]} : vector<8x96xf32> to vector<8x32xf32>
    %109 = arith.mulf %107, %91 : vector<8x32xf32>
    %110 = arith.mulf %106, %105 : vector<8x32xf32>
    %111 = arith.addf %109, %110 : vector<8x32xf32>
    %112 = math.tanh %111 : vector<8x32xf32>
    %113 = arith.mulf %108, %112 : vector<8x32xf32>
    %114 = vector.extract_strided_slice %10 {offsets = [40, 0], sizes = [8, 128], strides = [1, 1]} : vector<64x128xf32> to vector<8x128xf32>
    %115 = arith.truncf %113 : vector<8x32xf32> to vector<8x32xbf16>
    %cst_23 = arith.constant dense<0.000000e+00> : vector<8x128xf32>
    %116 = tpu.matmul %115, %11, %cst_23 {dimension_numbers = #tpu.dot_dimension_numbers<[1], [0], [0], [1], [0, 0, 1, 1], [], []>} : vector<8x32xbf16>, vector<32x128xbf16>, vector<8x128xf32> -> vector<8x128xf32>
    %117 = arith.addf %114, %116 : vector<8x128xf32>
    %118 = vector.extract_strided_slice %117 {offsets = [0, 0], sizes = [8, 96], strides = [1, 1]} : vector<8x128xf32> to vector<8x96xf32>
    %119 = arith.negf %118 : vector<8x96xf32>
    %120 = math.exp %119 : vector<8x96xf32>
    %cst_24 = arith.constant 1.000000e+00 : f32
    %121 = vector.broadcast %cst_24 : f32 to vector<8x96xf32>
    %122 = arith.addf %121, %120 : vector<8x96xf32>
    %123 = arith.divf %121, %122 : vector<8x96xf32>
    %124 = vector.extract_strided_slice %117 {offsets = [0, 96], sizes = [8, 32], strides = [1, 1]} : vector<8x128xf32> to vector<8x32xf32>
    %125 = math.tanh %124 : vector<8x32xf32>
    %126 = vector.extract_strided_slice %123 {offsets = [0, 0], sizes = [8, 32], strides = [1, 1]} : vector<8x96xf32> to vector<8x32xf32>
    %127 = vector.extract_strided_slice %123 {offsets = [0, 32], sizes = [8, 32], strides = [1, 1]} : vector<8x96xf32> to vector<8x32xf32>
    %128 = vector.extract_strided_slice %123 {offsets = [0, 64], sizes = [8, 32], strides = [1, 1]} : vector<8x96xf32> to vector<8x32xf32>
    %129 = arith.mulf %127, %111 : vector<8x32xf32>
    %130 = arith.mulf %126, %125 : vector<8x32xf32>
    %131 = arith.addf %129, %130 : vector<8x32xf32>
    %132 = math.tanh %131 : vector<8x32xf32>
    %133 = arith.mulf %128, %132 : vector<8x32xf32>
    %134 = vector.extract_strided_slice %10 {offsets = [48, 0], sizes = [8, 128], strides = [1, 1]} : vector<64x128xf32> to vector<8x128xf32>
    %135 = arith.truncf %133 : vector<8x32xf32> to vector<8x32xbf16>
    %cst_25 = arith.constant dense<0.000000e+00> : vector<8x128xf32>
    %136 = tpu.matmul %135, %11, %cst_25 {dimension_numbers = #tpu.dot_dimension_numbers<[1], [0], [0], [1], [0, 0, 1, 1], [], []>} : vector<8x32xbf16>, vector<32x128xbf16>, vector<8x128xf32> -> vector<8x128xf32>
    %137 = arith.addf %134, %136 : vector<8x128xf32>
    %138 = vector.extract_strided_slice %137 {offsets = [0, 0], sizes = [8, 96], strides = [1, 1]} : vector<8x128xf32> to vector<8x96xf32>
    %139 = arith.negf %138 : vector<8x96xf32>
    %140 = math.exp %139 : vector<8x96xf32>
    %cst_26 = arith.constant 1.000000e+00 : f32
    %141 = vector.broadcast %cst_26 : f32 to vector<8x96xf32>
    %142 = arith.addf %141, %140 : vector<8x96xf32>
    %143 = arith.divf %141, %142 : vector<8x96xf32>
    %144 = vector.extract_strided_slice %137 {offsets = [0, 96], sizes = [8, 32], strides = [1, 1]} : vector<8x128xf32> to vector<8x32xf32>
    %145 = math.tanh %144 : vector<8x32xf32>
    %146 = vector.extract_strided_slice %143 {offsets = [0, 0], sizes = [8, 32], strides = [1, 1]} : vector<8x96xf32> to vector<8x32xf32>
    %147 = vector.extract_strided_slice %143 {offsets = [0, 32], sizes = [8, 32], strides = [1, 1]} : vector<8x96xf32> to vector<8x32xf32>
    %148 = vector.extract_strided_slice %143 {offsets = [0, 64], sizes = [8, 32], strides = [1, 1]} : vector<8x96xf32> to vector<8x32xf32>
    %149 = arith.mulf %147, %131 : vector<8x32xf32>
    %150 = arith.mulf %146, %145 : vector<8x32xf32>
    %151 = arith.addf %149, %150 : vector<8x32xf32>
    %152 = math.tanh %151 : vector<8x32xf32>
    %153 = arith.mulf %148, %152 : vector<8x32xf32>
    %154 = vector.extract_strided_slice %10 {offsets = [56, 0], sizes = [8, 128], strides = [1, 1]} : vector<64x128xf32> to vector<8x128xf32>
    %155 = arith.truncf %153 : vector<8x32xf32> to vector<8x32xbf16>
    %cst_27 = arith.constant dense<0.000000e+00> : vector<8x128xf32>
    %156 = tpu.matmul %155, %11, %cst_27 {dimension_numbers = #tpu.dot_dimension_numbers<[1], [0], [0], [1], [0, 0, 1, 1], [], []>} : vector<8x32xbf16>, vector<32x128xbf16>, vector<8x128xf32> -> vector<8x128xf32>
    %157 = arith.addf %154, %156 : vector<8x128xf32>
    %158 = vector.extract_strided_slice %157 {offsets = [0, 0], sizes = [8, 96], strides = [1, 1]} : vector<8x128xf32> to vector<8x96xf32>
    %159 = arith.negf %158 : vector<8x96xf32>
    %160 = math.exp %159 : vector<8x96xf32>
    %cst_28 = arith.constant 1.000000e+00 : f32
    %161 = vector.broadcast %cst_28 : f32 to vector<8x96xf32>
    %162 = arith.addf %161, %160 : vector<8x96xf32>
    %163 = arith.divf %161, %162 : vector<8x96xf32>
    %164 = vector.extract_strided_slice %157 {offsets = [0, 96], sizes = [8, 32], strides = [1, 1]} : vector<8x128xf32> to vector<8x32xf32>
    %165 = math.tanh %164 : vector<8x32xf32>
    %166 = vector.extract_strided_slice %163 {offsets = [0, 0], sizes = [8, 32], strides = [1, 1]} : vector<8x96xf32> to vector<8x32xf32>
    %167 = vector.extract_strided_slice %163 {offsets = [0, 32], sizes = [8, 32], strides = [1, 1]} : vector<8x96xf32> to vector<8x32xf32>
    %168 = vector.extract_strided_slice %163 {offsets = [0, 64], sizes = [8, 32], strides = [1, 1]} : vector<8x96xf32> to vector<8x32xf32>
    %169 = arith.mulf %167, %151 : vector<8x32xf32>
    %170 = arith.mulf %166, %165 : vector<8x32xf32>
    %171 = arith.addf %169, %170 : vector<8x32xf32>
    %172 = math.tanh %171 : vector<8x32xf32>
    %173 = arith.mulf %168, %172 : vector<8x32xf32>
    %c0_29 = arith.constant 0 : index
    %c0_30 = arith.constant 0 : index
    %174 = vector.load %arg9[%c0_29, %c0_30] : memref<8x32xf32, #tpu.memory_space<vmem>>, vector<8x32xf32>
    tpu.vector_store %arg9[%c0_29, %c0_30], %173 {strides = array<i32>} : memref<8x32xf32, #tpu.memory_space<vmem>>, vector<8x32xf32>,
    %c0_31 = arith.constant 0 : index
    %c0_32 = arith.constant 0 : index
    %175 = vector.load %arg10[%c0_31, %c0_32] : memref<8x32xf32, #tpu.memory_space<vmem>>, vector<8x32xf32>
    tpu.vector_store %arg10[%c0_31, %c0_32], %171 {strides = array<i32>} : memref<8x32xf32, #tpu.memory_space<vmem>>, vector<8x32xf32>,
    %c0_i32_33 = arith.constant 0 : i32
    %176 = arith.cmpi eq, %arg1, %c0_i32_33 : i32
    %177 = arith.extui %176 : i1 to i32
    %c0_i32_34 = arith.constant 0 : i32
    %178 = arith.cmpi ne, %177, %c0_i32_34 : i32
    scf.if %178 {
      %179 = arith.truncf %173 : vector<8x32xf32> to vector<8x32xbf16>
      %c0_35 = arith.constant 0 : index
      %c0_36 = arith.constant 0 : index
      %180 = vector.load %arg6[%c0_35, %c0_36] : memref<32x128xbf16, #tpu.memory_space<vmem>>, vector<32x128xbf16>
      %cst_37 = arith.constant dense<0.000000e+00> : vector<8x128xf32>
      %181 = tpu.matmul %179, %180, %cst_37 {dimension_numbers = #tpu.dot_dimension_numbers<[1], [0], [0], [1], [0, 0, 1, 1], [], []>} : vector<8x32xbf16>, vector<32x128xbf16>, vector<8x128xf32> -> vector<8x128xf32>
      %c0_38 = arith.constant 0 : index
      %c0_39 = arith.constant 0 : index
      %182 = vector.load %arg7[%c0_38, %c0_39] : memref<1x128xf32, #tpu.memory_space<vmem>>, vector<1x128xf32>
      %183 = vector.broadcast %182 : vector<1x128xf32> to vector<8x128xf32>
      %184 = arith.addf %181, %183 : vector<8x128xf32>
      %c0_40 = arith.constant 0 : index
      %c0_41 = arith.constant 0 : index
      %185 = vector.load %arg8[%c0_40, %c0_41] : memref<8x128xf32, #tpu.memory_space<vmem>>, vector<8x128xf32>
      tpu.vector_store %arg8[%c0_40, %c0_41], %184 {strides = array<i32>} : memref<8x128xf32, #tpu.memory_space<vmem>>, vector<8x128xf32>,
    } else {
    }
    return
  }
  func.func @transform_0(%arg0: i32, %arg1: i32) -> (i32, i32, i32) {
    %c0_i32 = arith.constant 0 : i32
    %c0_i32_0 = arith.constant 0 : i32
    return %arg0, %arg1, %c0_i32 : i32, i32, i32
  }
  func.func @transform_1(%arg0: i32, %arg1: i32) -> (i32, i32) {
    %c0_i32 = arith.constant 0 : i32
    %c0_i32_0 = arith.constant 0 : i32
    %c0_i32_1 = arith.constant 0 : i32
    return %c0_i32, %c0_i32_0 : i32, i32
  }
  func.func @transform_2(%arg0: i32, %arg1: i32) -> (i32, i32) {
    %c0_i32 = arith.constant 0 : i32
    %c0_i32_0 = arith.constant 0 : i32
    %c0_i32_1 = arith.constant 0 : i32
    return %c0_i32, %c0_i32_0 : i32, i32
  }
  func.func @transform_3(%arg0: i32, %arg1: i32) -> (i32, i32) {
    %c0_i32 = arith.constant 0 : i32
    %c0_i32_0 = arith.constant 0 : i32
    %c0_i32_1 = arith.constant 0 : i32
    return %c0_i32, %c0_i32_0 : i32, i32
  }
  func.func @transform_4(%arg0: i32, %arg1: i32) -> (i32, i32) {
    %c0_i32 = arith.constant 0 : i32
    %c0_i32_0 = arith.constant 0 : i32
    %c0_i32_1 = arith.constant 0 : i32
    return %c0_i32, %c0_i32_0 : i32, i32
  }
  func.func @transform_5(%arg0: i32, %arg1: i32) -> (i32, i32) {
    %c0_i32 = arith.constant 0 : i32
    %c0_i32_0 = arith.constant 0 : i32
    %c0_i32_1 = arith.constant 0 : i32
    return %c0_i32, %c0_i32_0 : i32, i32
  }
  func.func @transform_6(%arg0: i32, %arg1: i32) -> (i32, i32) {
    %c0_i32 = arith.constant 0 : i32
    %c0_i32_0 = arith.constant 0 : i32
    return %arg0, %c0_i32 : i32, i32
  }
}

</mosaic_0001>

<llo_original>
// kernel: neural_network_forward.1
$region0: #{neural_network_forward.1}
  #allocation0 [shape = 'u32[]', space=smem, size = 0x4, offset = 0x4, fixed_abs, tag = 'smem constant byte address 0x4 - core index']
  #allocation1 [shape = 'u32[144,128]{1,0:T(1,128)}', space=vmem, size = 0x12000, scoped, tag = 'internal scratch']
  #allocation2 [shape = 'f32[8,32]{1,0:T(8,128)}', space=vmem, size = 0x1000, scoped, tag = 'scratch operand']
  #allocation3 [shape = 'f32[8,32]{1,0:T(8,128)}', space=vmem, size = 0x1000, scoped, tag = 'scratch operand']
  %s0 = inlined_call_operand.vmem [shape: f32[1,64,4], index: 0, kind: input, shape index: {}]
  %s1 = inlined_call_operand.vmem [shape: bf16[4,128], index: 1, kind: input, shape index: {}]
  %s2 = inlined_call_operand.vmem [shape: bf16[32,128], index: 2, kind: input, shape index: {}]
  %s3 = inlined_call_operand.vmem [shape: f32[1,128], index: 3, kind: input, shape index: {}]
  %s4 = inlined_call_operand.vmem [shape: bf16[32,128], index: 4, kind: input, shape index: {}]
  %s5 = inlined_call_operand.vmem [shape: f32[1,128], index: 5, kind: input, shape index: {}]
  %s6 = inlined_call_operand.vmem [shape: f32[8,128], index: 6, kind: output, shape index: {}]
  %s7 = sld [smem:[#allocation0]]
  $region42: #{neural_network_forward.1} parent=0
    _
  %s9 = ssub.s32 1, %s7
  %s10 = scalar_select 0, %s9, %s7
  // Predicated region
  $region2: #{neural_network_forward.1} parent=0 // pred_check
    _
  $region3: #{neural_network_forward.1} parent=0 // pred_check_branch
    %12 = sbr.rel (0) target = $region5
  $region4: #{neural_network_forward.1} parent=0 // pred_region
    _
  $region5: #{neural_network_forward.1} parent=0 // pred_fallthru
    _
  // Predicated region
  $region6: #{neural_network_forward.1} parent=0 // pred_check
    _
  $region7: #{neural_network_forward.1} parent=0 // pred_check_branch
    %14 = sbr.rel (0) target = $region9
  $region8: #{neural_network_forward.1} parent=0 // pred_region
    _
  $region9: #{neural_network_forward.1} parent=0 // pred_fallthru
    _
  // Predicated region
  $region10: #{neural_network_forward.1} parent=0 // pred_check
    _
  $region11: #{neural_network_forward.1} parent=0 // pred_check_branch
    %16 = sbr.rel (0) target = $region13
  $region12: #{neural_network_forward.1} parent=0 // pred_region
    _
  $region13: #{neural_network_forward.1} parent=0 // pred_fallthru
    _
  // Predicated region
  $region14: #{neural_network_forward.1} parent=0 // pred_check
    _
  $region15: #{neural_network_forward.1} parent=0 // pred_check_branch
    %18 = sbr.rel (0) target = $region17
  $region16: #{neural_network_forward.1} parent=0 // pred_region
    _
  $region17: #{neural_network_forward.1} parent=0 // pred_fallthru
    _
  // Predicated region
  $region18: #{neural_network_forward.1} parent=0 // pred_check
    _
  $region19: #{neural_network_forward.1} parent=0 // pred_check_branch
    %20 = sbr.rel (0) target = $region21
  $region20: #{neural_network_forward.1} parent=0 // pred_region
    _
  $region21: #{neural_network_forward.1} parent=0 // pred_fallthru
    _
  // Predicated region
  $region22: #{neural_network_forward.1} parent=0 // pred_check
    _
  $region23: #{neural_network_forward.1} parent=0 // pred_check_branch
    %22 = sbr.rel (0) target = $region25
  $region24: #{neural_network_forward.1} parent=0 // pred_region
    _
  $region25: #{neural_network_forward.1} parent=0 // pred_fallthru
    _
  %p24 = scmp.eq.s32.totalorder 0, 0
  // Predicated region
  $region26: #{neural_network_forward.1} parent=0 // pred_check
    %p25 = pneg %p24
  $region27: #{neural_network_forward.1} parent=0 // pred_check_branch
    %27 = sbr.rel (%p25) target = $region29
  $region28: #{neural_network_forward.1} parent=0 // pred_region
    %vm28 = vcmask 261120
    %29 = vst.msk [vmem:[#allocation2] sm:$0xff] %vm28, 0.0
    %30 = vst.msk [vmem:[#allocation3] sm:$0xff] %vm28, 0.0
  $region29: #{neural_network_forward.1} parent=0 // pred_fallthru
    _
  %v31 = vld [vmem:[%s0] sm:$0xff]
  %v32 = vld [vmem:[%s0 + $0x8] sm:$0xff]
  %v33 = vld [vmem:[%s0 + $0x10] sm:$0xff]
  %v34 = vld [vmem:[%s0 + $0x18] sm:$0xff]
  %v35 = vld [vmem:[%s0 + $0x20] sm:$0xff]
  %v36 = vld [vmem:[%s0 + $0x28] sm:$0xff]
  %v37 = vld [vmem:[%s0 + $0x30] sm:$0xff]
  %v38 = vld [vmem:[%s0 + $0x38] sm:$0xff]
  %v39 = vpack.c.bf16 %v32, %v31
  %v40 = vpack.c.bf16 %v34, %v33
  %v41 = vpack.c.bf16 %v36, %v35
  %v42 = vpack.c.bf16 %v38, %v37
  %v43 = vld [vmem:[%s1] sm:$0x3]
  %v44 = vld [vmem:[%s3] sm:$0x1]
  %v46 = vlaneseq
  %v47 = vshrl.u32 %v46, 7
  %v48 = vsub.s32 0, %v47
  %v49 = vrot.slane %v44, %v48
  %vm51 = vcmask 31744
  %v53 = vsel %vm51, %v39, 0
  %v56 = vsel %vm51, %v40, 0
  %v59 = vsel %vm51, %v41, 0
  %v62 = vsel %vm51, %v42, 0
  %vm64 = vcmask 1041408
  %v66 = vsel %vm64, %v43, 0
  %68 = vmatprep.subr.bf16.mxu0 0
  %69 = vmatpush1.bf16.msra.mxu0 0
  %70 = vmatprep.subr.bf16.mxu0 0
  %71 = vmatpush1.bf16.msra.mxu0 0
  %72 = vmatprep.subr.bf16.mxu0 0
  %73 = vmatpush1.bf16.msra.mxu0 0
  %74 = vmatprep.subr.bf16.mxu0 0
  %75 = vmatpush1.bf16.msra.mxu0 0
  %76 = vmatprep.subr.bf16.mxu0 0
  %77 = vmatpush1.bf16.msra.mxu0 0
  %78 = vmatprep.subr.bf16.mxu0 0
  %79 = vmatpush1.bf16.msra.mxu0 0
  %80 = vmatprep.subr.bf16.mxu0 0
  %81 = vmatpush1.bf16.msra.mxu0 0
  %82 = vmatprep.subr.bf16.mxu0 0
  %83 = vmatpush1.bf16.msra.mxu0 %v66
  %84 = vmatprep.subr.bf16.mxu0 0
  %85 = vmatpush2.bf16.msra.mxu0 0
  %86 = vmatprep.subr.bf16.mxu0 0
  %87 = vmatpush2.bf16.msra.mxu0 0
  %88 = vmatprep.subr.bf16.mxu0 0
  %89 = vmatpush2.bf16.msra.mxu0 0
  %90 = vmatprep.subr.bf16.mxu0 0
  %91 = vmatpush2.bf16.msra.mxu0 0
  %92 = vmatprep.subr.bf16.mxu0 0
  %93 = vmatpush2.bf16.msra.mxu0 0
  %94 = vmatprep.subr.bf16.mxu0 0
  %95 = vmatpush2.bf16.msra.mxu0 0
  %96 = vmatprep.subr.bf16.mxu0 0
  %97 = vmatpush2.bf16.msra.mxu0 0
  %98 = vmatprep.subr.bf16.mxu0 0
  %99 = vmatpush2.bf16.msra.mxu0 0
  %100 = vmatprep.mubr.bf16.mxu0 0
  %101 = vmatmul.mubr.bf16.gmra.mxu0 %v53
  %v102 = vpop.f32.mrf.mxu0
  %v103 = vadd.f32 %v49, %v102
  %v104 = vpop.f32.mrf.mxu0
  %v105 = vpop.f32.mrf.mxu0
  %v106 = vadd.f32 %v49, %v105
  %v107 = vpop.f32.mrf.mxu0
  %108 = vmatprep.mubr.bf16.mxu0 0
  %109 = vmatmul.mubr.bf16.gmra.mxu0 %v56
  %v110 = vpop.f32.mrf.mxu0
  %v111 = vadd.f32 %v49, %v110
  %v112 = vpop.f32.mrf.mxu0
  %v113 = vpop.f32.mrf.mxu0
  %v114 = vadd.f32 %v49, %v113
  %v115 = vpop.f32.mrf.mxu0
  %116 = vmatprep.mubr.bf16.mxu0 0
  %117 = vmatmul.mubr.bf16.gmra.mxu0 %v59
  %v118 = vpop.f32.mrf.mxu0
  %v119 = vadd.f32 %v49, %v118
  %v120 = vpop.f32.mrf.mxu0
  %v121 = vpop.f32.mrf.mxu0
  %v122 = vadd.f32 %v49, %v121
  %v123 = vpop.f32.mrf.mxu0
  %124 = vmatprep.mubr.bf16.mxu0 0
  %125 = vmatmul.mubr.bf16.gmra.mxu0 %v62
  %v126 = vpop.f32.mrf.mxu0
  %v127 = vadd.f32 %v49, %v126
  %v128 = vpop.f32.mrf.mxu0
  %v129 = vpop.f32.mrf.mxu0
  %v130 = vadd.f32 %v49, %v129
  %v131 = vpop.f32.mrf.mxu0
  %132 = vdwg.mxu0
  %v133 = vld [vmem:[%s2] sm:$0xf]
  %v134 = vld [vmem:[%s2 + $0x4] sm:$0xf]
  %v135 = vld [vmem:[%s2 + $0x8] sm:$0xf]
  %v136 = vld [vmem:[%s2 + $0xc] sm:$0xf]
  %v137 = vld [vmem:[#allocation2] sm:$0xff]
  %v138 = vld [vmem:[#allocation3] sm:$0xff]
  %v139 = vpack.c.bf16 %v137, %v137
  %v144 = vunpack.c.l.b16 %v133
  %v145 = vunpack.c.l.b16 %v134
  %v146 = vunpack.c.l.b16 %v135
  %v147 = vunpack.c.l.b16 %v136
  %v148 = vpack.c.b16 %v145, %v144
  %v149 = vpack.c.b16 %v147, %v146
  %vm152 = vcmask 261120
  %v154 = vsel %vm152, %v139, 0
  %156 = vmatprep.subr.bf16.mxu0 0
  %157 = vmatpush1.bf16.msra.mxu0 0
  %158 = vmatprep.subr.bf16.mxu0 0
  %159 = vmatpush1.bf16.msra.mxu0 0
  %160 = vmatprep.subr.bf16.mxu0 0
  %161 = vmatpush1.bf16.msra.mxu0 0
  %162 = vmatprep.subr.bf16.mxu0 0
  %163 = vmatpush1.bf16.msra.mxu0 0
  %164 = vmatprep.subr.bf16.mxu0 0
  %165 = vmatpush1.bf16.msra.mxu0 0
  %166 = vmatprep.subr.bf16.mxu0 0
  %167 = vmatpush1.bf16.msra.mxu0 0
  %168 = vmatprep.subr.bf16.mxu0 0
  %169 = vmatpush1.bf16.msra.mxu0 %v149
  %170 = vmatprep.subr.bf16.mxu0 0
  %171 = vmatpush1.bf16.msra.mxu0 %v148
  %172 = vmatprep.subr.bf16.mxu0 0
  %173 = vmatpush2.bf16.msra.mxu0 0
  %174 = vmatprep.subr.bf16.mxu0 0
  %175 = vmatpush2.bf16.msra.mxu0 0
  %176 = vmatprep.subr.bf16.mxu0 0
  %177 = vmatpush2.bf16.msra.mxu0 0
  %178 = vmatprep.subr.bf16.mxu0 0
  %179 = vmatpush2.bf16.msra.mxu0 0
  %180 = vmatprep.subr.bf16.mxu0 0
  %181 = vmatpush2.bf16.msra.mxu0 0
  %182 = vmatprep.subr.bf16.mxu0 0
  %183 = vmatpush2.bf16.msra.mxu0 0
  %184 = vmatprep.subr.bf16.mxu0 0
  %185 = vmatpush2.bf16.msra.mxu0 0
  %186 = vmatprep.subr.bf16.mxu0 0
  %187 = vmatpush2.bf16.msra.mxu0 0
  %188 = vmatprep.mubr.bf16.mxu0 0
  %189 = vmatmul.mubr.bf16.gmra.mxu0 %v154
  %v190 = vpop.f32.mrf.mxu0
  %v191 = vadd.f32 0.0, %v190
  %v192 = vpop.f32.mrf.mxu0
  %v193 = vpop.f32.mrf.mxu0
  %v194 = vpop.f32.mrf.mxu0
  %195 = vdwg.mxu0
  %v196 = vadd.f32 %v103, %v191
  %v197 = vxor.u32 %v196, 2147483648
  %v198 = vmul.f32 %v197, 1.442695
  %v199 = vpow.pop %v198
  %v200 = vadd.f32 %v199, 1.0
  %v201 = vrcp.pop %v200
  %v202 = vmul.f32 1.0, %v201
  %v203 = vtanh.pop %v196
  %205 = vrot.lane.b32.xlu0 %v138, 32
  %v206 = vpop.permute.xlu0 %205
  %v208 = vmul.f32 %v202, %v206
  %210 = vrot.lane.b32.xlu0 %v203, 32
  %v211 = vpop.permute.xlu0 %210
  %v213 = vmul.f32 %v202, %v211
  %215 = vrot.lane.b32.xlu0 %v213, 32
  %v216 = vpop.permute.xlu0 %215
  %v218 = vadd.f32 %v208, %v216
  %v219 = vtanh.pop %v218
  %221 = vrot.lane.b32.xlu0 %v219, 32
  %v222 = vpop.permute.xlu0 %221
  %v224 = vmul.f32 %v202, %v222
  %v225 = vpack.c.bf16 %v224, %v224
  %227 = vrot.lane.b32.xlu0 %v225, 64
  %v228 = vpop.permute.xlu0 %227
  %v230 = vsel %vm152, %v228, 0
  %232 = vmatprep.subr.bf16.mxu0 0
  %233 = vmatpush1.bf16.msra.mxu0 0
  %234 = vmatprep.subr.bf16.mxu0 0
  %235 = vmatpush1.bf16.msra.mxu0 0
  %236 = vmatprep.subr.bf16.mxu0 0
  %237 = vmatpush1.bf16.msra.mxu0 0
  %238 = vmatprep.subr.bf16.mxu0 0
  %239 = vmatpush1.bf16.msra.mxu0 0
  %240 = vmatprep.subr.bf16.mxu0 0
  %241 = vmatpush1.bf16.msra.mxu0 0
  %242 = vmatprep.subr.bf16.mxu0 0
  %243 = vmatpush1.bf16.msra.mxu0 0
  %244 = vmatprep.subr.bf16.mxu0 0
  %245 = vmatpush1.bf16.msra.mxu0 %v149
  %246 = vmatprep.subr.bf16.mxu0 0
  %247 = vmatpush1.bf16.msra.mxu0 %v148
  %248 = vmatprep.subr.bf16.mxu0 0
  %249 = vmatpush2.bf16.msra.mxu0 0
  %250 = vmatprep.subr.bf16.mxu0 0
  %251 = vmatpush2.bf16.msra.mxu0 0
  %252 = vmatprep.subr.bf16.mxu0 0
  %253 = vmatpush2.bf16.msra.mxu0 0
  %254 = vmatprep.subr.bf16.mxu0 0
  %255 = vmatpush2.bf16.msra.mxu0 0
  %256 = vmatprep.subr.bf16.mxu0 0
  %257 = vmatpush2.bf16.msra.mxu0 0
  %258 = vmatprep.subr.bf16.mxu0 0
  %259 = vmatpush2.bf16.msra.mxu0 0
  %260 = vmatprep.subr.bf16.mxu0 0
  %261 = vmatpush2.bf16.msra.mxu0 0
  %262 = vmatprep.subr.bf16.mxu0 0
  %263 = vmatpush2.bf16.msra.mxu0 0
  %264 = vmatprep.mubr.bf16.mxu0 0
  %265 = vmatmul.mubr.bf16.gmra.mxu0 %v230
  %v266 = vpop.f32.mrf.mxu0
  %v267 = vadd.f32 0.0, %v266
  %v268 = vpop.f32.mrf.mxu0
  %v269 = vpop.f32.mrf.mxu0
  %v270 = vpop.f32.mrf.mxu0
  %271 = vdwg.mxu0
  %v272 = vadd.f32 %v106, %v267
  %v273 = vxor.u32 %v272, 2147483648
  %v274 = vmul.f32 %v273, 1.442695
  %v275 = vpow.pop %v274
  %v276 = vadd.f32 %v275, 1.0
  %v277 = vrcp.pop %v276
  %v278 = vmul.f32 1.0, %v277
  %v279 = vtanh.pop %v272
  %v280 = vmul.f32 %v278, %v218
  %282 = vrot.lane.b32.xlu0 %v279, 32
  %v283 = vpop.permute.xlu0 %282
  %v285 = vmul.f32 %v278, %v283
  %287 = vrot.lane.b32.xlu0 %v285, 32
  %v288 = vpop.permute.xlu0 %287
  %v290 = vadd.f32 %v280, %v288
  %v291 = vtanh.pop %v290
  %293 = vrot.lane.b32.xlu0 %v291, 32
  %v294 = vpop.permute.xlu0 %293
  %v296 = vmul.f32 %v278, %v294
  %v297 = vpack.c.bf16 %v296, %v296
  %299 = vrot.lane.b32.xlu0 %v297, 64
  %v300 = vpop.permute.xlu0 %299
  %v302 = vsel %vm152, %v300, 0
  %304 = vmatprep.subr.bf16.mxu0 0
  %305 = vmatpush1.bf16.msra.mxu0 0
  %306 = vmatprep.subr.bf16.mxu0 0
  %307 = vmatpush1.bf16.msra.mxu0 0
  %308 = vmatprep.subr.bf16.mxu0 0
  %309 = vmatpush1.bf16.msra.mxu0 0
  %310 = vmatprep.subr.bf16.mxu0 0
  %311 = vmatpush1.bf16.msra.mxu0 0
  %312 = vmatprep.subr.bf16.mxu0 0
  %313 = vmatpush1.bf16.msra.mxu0 0
  %314 = vmatprep.subr.bf16.mxu0 0
  %315 = vmatpush1.bf16.msra.mxu0 0
  %316 = vmatprep.subr.bf16.mxu0 0
  %317 = vmatpush1.bf16.msra.mxu0 %v149
  %318 = vmatprep.subr.bf16.mxu0 0
  %319 = vmatpush1.bf16.msra.mxu0 %v148
  %320 = vmatprep.subr.bf16.mxu0 0
  %321 = vmatpush2.bf16.msra.mxu0 0
  %322 = vmatprep.subr.bf16.mxu0 0
  %323 = vmatpush2.bf16.msra.mxu0 0
  %324 = vmatprep.subr.bf16.mxu0 0
  %325 = vmatpush2.bf16.msra.mxu0 0
  %326 = vmatprep.subr.bf16.mxu0 0
  %327 = vmatpush2.bf16.msra.mxu0 0
  %328 = vmatprep.subr.bf16.mxu0 0
  %329 = vmatpush2.bf16.msra.mxu0 0
  %330 = vmatprep.subr.bf16.mxu0 0
  %331 = vmatpush2.bf16.msra.mxu0 0
  %332 = vmatprep.subr.bf16.mxu0 0
  %333 = vmatpush2.bf16.msra.mxu0 0
  %334 = vmatprep.subr.bf16.mxu0 0
  %335 = vmatpush2.bf16.msra.mxu0 0
  %336 = vmatprep.mubr.bf16.mxu0 0
  %337 = vmatmul.mubr.bf16.gmra.mxu0 %v302
  %v338 = vpop.f32.mrf.mxu0
  %v339 = vadd.f32 0.0, %v338
  %v340 = vpop.f32.mrf.mxu0
  %v341 = vpop.f32.mrf.mxu0
  %v342 = vpop.f32.mrf.mxu0
  %343 = vdwg.mxu0
  %v344 = vadd.f32 %v111, %v339
  %v345 = vxor.u32 %v344, 2147483648
  %v346 = vmul.f32 %v345, 1.442695
  %v347 = vpow.pop %v346
  %v348 = vadd.f32 %v347, 1.0
  %v349 = vrcp.pop %v348
  %v350 = vmul.f32 1.0, %v349
  %v351 = vtanh.pop %v344
  %v352 = vmul.f32 %v350, %v290
  %354 = vrot.lane.b32.xlu0 %v351, 32
  %v355 = vpop.permute.xlu0 %354
  %v357 = vmul.f32 %v350, %v355
  %359 = vrot.lane.b32.xlu0 %v357, 32
  %v360 = vpop.permute.xlu0 %359
  %v362 = vadd.f32 %v352, %v360
  %v363 = vtanh.pop %v362
  %365 = vrot.lane.b32.xlu0 %v363, 32
  %v366 = vpop.permute.xlu0 %365
  %v368 = vmul.f32 %v350, %v366
  %v369 = vpack.c.bf16 %v368, %v368
  %371 = vrot.lane.b32.xlu0 %v369, 64
  %v372 = vpop.permute.xlu0 %371
  %v374 = vsel %vm152, %v372, 0
  %376 = vmatprep.subr.bf16.mxu0 0
  %377 = vmatpush1.bf16.msra.mxu0 0
  %378 = vmatprep.subr.bf16.mxu0 0
  %379 = vmatpush1.bf16.msra.mxu0 0
  %380 = vmatprep.subr.bf16.mxu0 0
  %381 = vmatpush1.bf16.msra.mxu0 0
  %382 = vmatprep.subr.bf16.mxu0 0
  %383 = vmatpush1.bf16.msra.mxu0 0
  %384 = vmatprep.subr.bf16.mxu0 0
  %385 = vmatpush1.bf16.msra.mxu0 0
  %386 = vmatprep.subr.bf16.mxu0 0
  %387 = vmatpush1.bf16.msra.mxu0 0
  %388 = vmatprep.subr.bf16.mxu0 0
  %389 = vmatpush1.bf16.msra.mxu0 %v149
  %390 = vmatprep.subr.bf16.mxu0 0
  %391 = vmatpush1.bf16.msra.mxu0 %v148
  %392 = vmatprep.subr.bf16.mxu0 0
  %393 = vmatpush2.bf16.msra.mxu0 0
  %394 = vmatprep.subr.bf16.mxu0 0
  %395 = vmatpush2.bf16.msra.mxu0 0
  %396 = vmatprep.subr.bf16.mxu0 0
  %397 = vmatpush2.bf16.msra.mxu0 0
  %398 = vmatprep.subr.bf16.mxu0 0
  %399 = vmatpush2.bf16.msra.mxu0 0
  %400 = vmatprep.subr.bf16.mxu0 0
  %401 = vmatpush2.bf16.msra.mxu0 0
  %402 = vmatprep.subr.bf16.mxu0 0
  %403 = vmatpush2.bf16.msra.mxu0 0
  %404 = vmatprep.subr.bf16.mxu0 0
  %405 = vmatpush2.bf16.msra.mxu0 0
  %406 = vmatprep.subr.bf16.mxu0 0
  %407 = vmatpush2.bf16.msra.mxu0 0
  %408 = vmatprep.mubr.bf16.mxu0 0
  %409 = vmatmul.mubr.bf16.gmra.mxu0 %v374
  %v410 = vpop.f32.mrf.mxu0
  %v411 = vadd.f32 0.0, %v410
  %v412 = vpop.f32.mrf.mxu0
  %v413 = vpop.f32.mrf.mxu0
  %v414 = vpop.f32.mrf.mxu0
  %415 = vdwg.mxu0
  %v416 = vadd.f32 %v114, %v411
  %v417 = vxor.u32 %v416, 2147483648
  %v418 = vmul.f32 %v417, 1.442695
  %v419 = vpow.pop %v418
  %v420 = vadd.f32 %v419, 1.0
  %v421 = vrcp.pop %v420
  %v422 = vmul.f32 1.0, %v421
  %v423 = vtanh.pop %v416
  %v424 = vmul.f32 %v422, %v362
  %426 = vrot.lane.b32.xlu0 %v423, 32
  %v427 = vpop.permute.xlu0 %426
  %v429 = vmul.f32 %v422, %v427
  %431 = vrot.lane.b32.xlu0 %v429, 32
  %v432 = vpop.permute.xlu0 %431
  %v434 = vadd.f32 %v424, %v432
  %v435 = vtanh.pop %v434
  %437 = vrot.lane.b32.xlu0 %v435, 32
  %v438 = vpop.permute.xlu0 %437
  %v440 = vmul.f32 %v422, %v438
  %v441 = vpack.c.bf16 %v440, %v440
  %443 = vrot.lane.b32.xlu0 %v441, 64
  %v444 = vpop.permute.xlu0 %443
  %v446 = vsel %vm152, %v444, 0
  %448 = vmatprep.subr.bf16.mxu0 0
  %449 = vmatpush1.bf16.msra.mxu0 0
  %450 = vmatprep.subr.bf16.mxu0 0
  %451 = vmatpush1.bf16.msra.mxu0 0
  %452 = vmatprep.subr.bf16.mxu0 0
  %453 = vmatpush1.bf16.msra.mxu0 0
  %454 = vmatprep.subr.bf16.mxu0 0
  %455 = vmatpush1.bf16.msra.mxu0 0
  %456 = vmatprep.subr.bf16.mxu0 0
  %457 = vmatpush1.bf16.msra.mxu0 0
  %458 = vmatprep.subr.bf16.mxu0 0
  %459 = vmatpush1.bf16.msra.mxu0 0
  %460 = vmatprep.subr.bf16.mxu0 0
  %461 = vmatpush1.bf16.msra.mxu0 %v149
  %462 = vmatprep.subr.bf16.mxu0 0
  %463 = vmatpush1.bf16.msra.mxu0 %v148
  %464 = vmatprep.subr.bf16.mxu0 0
  %465 = vmatpush2.bf16.msra.mxu0 0
  %466 = vmatprep.subr.bf16.mxu0 0
  %467 = vmatpush2.bf16.msra.mxu0 0
  %468 = vmatprep.subr.bf16.mxu0 0
  %469 = vmatpush2.bf16.msra.mxu0 0
  %470 = vmatprep.subr.bf16.mxu0 0
  %471 = vmatpush2.bf16.msra.mxu0 0
  %472 = vmatprep.subr.bf16.mxu0 0
  %473 = vmatpush2.bf16.msra.mxu0 0
  %474 = vmatprep.subr.bf16.mxu0 0
  %475 = vmatpush2.bf16.msra.mxu0 0
  %476 = vmatprep.subr.bf16.mxu0 0
  %477 = vmatpush2.bf16.msra.mxu0 0
  %478 = vmatprep.subr.bf16.mxu0 0
  %479 = vmatpush2.bf16.msra.mxu0 0
  %480 = vmatprep.mubr.bf16.mxu0 0
  %481 = vmatmul.mubr.bf16.gmra.mxu0 %v446
  %v482 = vpop.f32.mrf.mxu0
  %v483 = vadd.f32 0.0, %v482
  %v484 = vpop.f32.mrf.mxu0
  %v485 = vpop.f32.mrf.mxu0
  %v486 = vpop.f32.mrf.mxu0
  %487 = vdwg.mxu0
  %v488 = vadd.f32 %v119, %v483
  %v489 = vxor.u32 %v488, 2147483648
  %v490 = vmul.f32 %v489, 1.442695
  %v491 = vpow.pop %v490
  %v492 = vadd.f32 %v491, 1.0
  %v493 = vrcp.pop %v492
  %v494 = vmul.f32 1.0, %v493
  %v495 = vtanh.pop %v488
  %v496 = vmul.f32 %v494, %v434
  %498 = vrot.lane.b32.xlu0 %v495, 32
  %v499 = vpop.permute.xlu0 %498
  %v501 = vmul.f32 %v494, %v499
  %503 = vrot.lane.b32.xlu0 %v501, 32
  %v504 = vpop.permute.xlu0 %503
  %v506 = vadd.f32 %v496, %v504
  %v507 = vtanh.pop %v506
  %509 = vrot.lane.b32.xlu0 %v507, 32
  %v510 = vpop.permute.xlu0 %509
  %v512 = vmul.f32 %v494, %v510
  %v513 = vpack.c.bf16 %v512, %v512
  %515 = vrot.lane.b32.xlu0 %v513, 64
  %v516 = vpop.permute.xlu0 %515
  %v518 = vsel %vm152, %v516, 0
  %520 = vmatprep.subr.bf16.mxu0 0
  %521 = vmatpush1.bf16.msra.mxu0 0
  %522 = vmatprep.subr.bf16.mxu0 0
  %523 = vmatpush1.bf16.msra.mxu0 0
  %524 = vmatprep.subr.bf16.mxu0 0
  %525 = vmatpush1.bf16.msra.mxu0 0
  %526 = vmatprep.subr.bf16.mxu0 0
  %527 = vmatpush1.bf16.msra.mxu0 0
  %528 = vmatprep.subr.bf16.mxu0 0
  %529 = vmatpush1.bf16.msra.mxu0 0
  %530 = vmatprep.subr.bf16.mxu0 0
  %531 = vmatpush1.bf16.msra.mxu0 0
  %532 = vmatprep.subr.bf16.mxu0 0
  %533 = vmatpush1.bf16.msra.mxu0 %v149
  %534 = vmatprep.subr.bf16.mxu0 0
  %535 = vmatpush1.bf16.msra.mxu0 %v148
  %536 = vmatprep.subr.bf16.mxu0 0
  %537 = vmatpush2.bf16.msra.mxu0 0
  %538 = vmatprep.subr.bf16.mxu0 0
  %539 = vmatpush2.bf16.msra.mxu0 0
  %540 = vmatprep.subr.bf16.mxu0 0
  %541 = vmatpush2.bf16.msra.mxu0 0
  %542 = vmatprep.subr.bf16.mxu0 0
  %543 = vmatpush2.bf16.msra.mxu0 0
  %544 = vmatprep.subr.bf16.mxu0 0
  %545 = vmatpush2.bf16.msra.mxu0 0
  %546 = vmatprep.subr.bf16.mxu0 0
  %547 = vmatpush2.bf16.msra.mxu0 0
  %548 = vmatprep.subr.bf16.mxu0 0
  %549 = vmatpush2.bf16.msra.mxu0 0
  %550 = vmatprep.subr.bf16.mxu0 0
  %551 = vmatpush2.bf16.msra.mxu0 0
  %552 = vmatprep.mubr.bf16.mxu0 0
  %553 = vmatmul.mubr.bf16.gmra.mxu0 %v518
  %v554 = vpop.f32.mrf.mxu0
  %v555 = vadd.f32 0.0, %v554
  %v556 = vpop.f32.mrf.mxu0
  %v557 = vpop.f32.mrf.mxu0
  %v558 = vpop.f32.mrf.mxu0
  %559 = vdwg.mxu0
  %v560 = vadd.f32 %v122, %v555
  %v561 = vxor.u32 %v560, 2147483648
  %v562 = vmul.f32 %v561, 1.442695
  %v563 = vpow.pop %v562
  %v564 = vadd.f32 %v563, 1.0
  %v565 = vrcp.pop %v564
  %v566 = vmul.f32 1.0, %v565
  %v567 = vtanh.pop %v560
  %v568 = vmul.f32 %v566, %v506
  %570 = vrot.lane.b32.xlu0 %v567, 32
  %v571 = vpop.permute.xlu0 %570
  %v573 = vmul.f32 %v566, %v571
  %575 = vrot.lane.b32.xlu0 %v573, 32
  %v576 = vpop.permute.xlu0 %575
  %v578 = vadd.f32 %v568, %v576
  %v579 = vtanh.pop %v578
  %581 = vrot.lane.b32.xlu0 %v579, 32
  %v582 = vpop.permute.xlu0 %581
  %v584 = vmul.f32 %v566, %v582
  %v585 = vpack.c.bf16 %v584, %v584
  %587 = vrot.lane.b32.xlu0 %v585, 64
  %v588 = vpop.permute.xlu0 %587
  %v590 = vsel %vm152, %v588, 0
  %592 = vmatprep.subr.bf16.mxu0 0
  %593 = vmatpush1.bf16.msra.mxu0 0
  %594 = vmatprep.subr.bf16.mxu0 0
  %595 = vmatpush1.bf16.msra.mxu0 0
  %596 = vmatprep.subr.bf16.mxu0 0
  %597 = vmatpush1.bf16.msra.mxu0 0
  %598 = vmatprep.subr.bf16.mxu0 0
  %599 = vmatpush1.bf16.msra.mxu0 0
  %600 = vmatprep.subr.bf16.mxu0 0
  %601 = vmatpush1.bf16.msra.mxu0 0
  %602 = vmatprep.subr.bf16.mxu0 0
  %603 = vmatpush1.bf16.msra.mxu0 0
  %604 = vmatprep.subr.bf16.mxu0 0
  %605 = vmatpush1.bf16.msra.mxu0 %v149
  %606 = vmatprep.subr.bf16.mxu0 0
  %607 = vmatpush1.bf16.msra.mxu0 %v148
  %608 = vmatprep.subr.bf16.mxu0 0
  %609 = vmatpush2.bf16.msra.mxu0 0
  %610 = vmatprep.subr.bf16.mxu0 0
  %611 = vmatpush2.bf16.msra.mxu0 0
  %612 = vmatprep.subr.bf16.mxu0 0
  %613 = vmatpush2.bf16.msra.mxu0 0
  %614 = vmatprep.subr.bf16.mxu0 0
  %615 = vmatpush2.bf16.msra.mxu0 0
  %616 = vmatprep.subr.bf16.mxu0 0
  %617 = vmatpush2.bf16.msra.mxu0 0
  %618 = vmatprep.subr.bf16.mxu0 0
  %619 = vmatpush2.bf16.msra.mxu0 0
  %620 = vmatprep.subr.bf16.mxu0 0
  %621 = vmatpush2.bf16.msra.mxu0 0
  %622 = vmatprep.subr.bf16.mxu0 0
  %623 = vmatpush2.bf16.msra.mxu0 0
  %624 = vmatprep.mubr.bf16.mxu0 0
  %625 = vmatmul.mubr.bf16.gmra.mxu0 %v590
  %v626 = vpop.f32.mrf.mxu0
  %v627 = vadd.f32 0.0, %v626
  %v628 = vpop.f32.mrf.mxu0
  %v629 = vpop.f32.mrf.mxu0
  %v630 = vpop.f32.mrf.mxu0
  %631 = vdwg.mxu0
  %v632 = vadd.f32 %v127, %v627
  %v633 = vxor.u32 %v632, 2147483648
  %v634 = vmul.f32 %v633, 1.442695
  %v635 = vpow.pop %v634
  %v636 = vadd.f32 %v635, 1.0
  %v637 = vrcp.pop %v636
  %v638 = vmul.f32 1.0, %v637
  %v639 = vtanh.pop %v632
  %v640 = vmul.f32 %v638, %v578
  %642 = vrot.lane.b32.xlu0 %v639, 32
  %v643 = vpop.permute.xlu0 %642
  %v645 = vmul.f32 %v638, %v643
  %647 = vrot.lane.b32.xlu0 %v645, 32
  %v648 = vpop.permute.xlu0 %647
  %v650 = vadd.f32 %v640, %v648
  %v651 = vtanh.pop %v650
  %653 = vrot.lane.b32.xlu0 %v651, 32
  %v654 = vpop.permute.xlu0 %653
  %v656 = vmul.f32 %v638, %v654
  %v657 = vpack.c.bf16 %v656, %v656
  %659 = vrot.lane.b32.xlu0 %v657, 64
  %v660 = vpop.permute.xlu0 %659
  %v662 = vsel %vm152, %v660, 0
  %664 = vmatprep.subr.bf16.mxu0 0
  %665 = vmatpush1.bf16.msra.mxu0 0
  %666 = vmatprep.subr.bf16.mxu0 0
  %667 = vmatpush1.bf16.msra.mxu0 0
  %668 = vmatprep.subr.bf16.mxu0 0
  %669 = vmatpush1.bf16.msra.mxu0 0
  %670 = vmatprep.subr.bf16.mxu0 0
  %671 = vmatpush1.bf16.msra.mxu0 0
  %672 = vmatprep.subr.bf16.mxu0 0
  %673 = vmatpush1.bf16.msra.mxu0 0
  %674 = vmatprep.subr.bf16.mxu0 0
  %675 = vmatpush1.bf16.msra.mxu0 0
  %676 = vmatprep.subr.bf16.mxu0 0
  %677 = vmatpush1.bf16.msra.mxu0 %v149
  %678 = vmatprep.subr.bf16.mxu0 0
  %679 = vmatpush1.bf16.msra.mxu0 %v148
  %680 = vmatprep.subr.bf16.mxu0 0
  %681 = vmatpush2.bf16.msra.mxu0 0
  %682 = vmatprep.subr.bf16.mxu0 0
  %683 = vmatpush2.bf16.msra.mxu0 0
  %684 = vmatprep.subr.bf16.mxu0 0
  %685 = vmatpush2.bf16.msra.mxu0 0
  %686 = vmatprep.subr.bf16.mxu0 0
  %687 = vmatpush2.bf16.msra.mxu0 0
  %688 = vmatprep.subr.bf16.mxu0 0
  %689 = vmatpush2.bf16.msra.mxu0 0
  %690 = vmatprep.subr.bf16.mxu0 0
  %691 = vmatpush2.bf16.msra.mxu0 0
  %692 = vmatprep.subr.bf16.mxu0 0
  %693 = vmatpush2.bf16.msra.mxu0 0
  %694 = vmatprep.subr.bf16.mxu0 0
  %695 = vmatpush2.bf16.msra.mxu0 0
  %696 = vmatprep.mubr.bf16.mxu0 0
  %697 = vmatmul.mubr.bf16.gmra.mxu0 %v662
  %v698 = vpop.f32.mrf.mxu0
  %v699 = vadd.f32 0.0, %v698
  %v700 = vpop.f32.mrf.mxu0
  %v701 = vpop.f32.mrf.mxu0
  %v702 = vpop.f32.mrf.mxu0
  %703 = vdwg.mxu0
  %v704 = vadd.f32 %v130, %v699
  %v705 = vxor.u32 %v704, 2147483648
  %v706 = vmul.f32 %v705, 1.442695
  %v707 = vpow.pop %v706
  %v708 = vadd.f32 %v707, 1.0
  %v709 = vrcp.pop %v708
  %v710 = vmul.f32 1.0, %v709
  %v711 = vtanh.pop %v704
  %v712 = vmul.f32 %v710, %v650
  %714 = vrot.lane.b32.xlu0 %v711, 32
  %v715 = vpop.permute.xlu0 %714
  %v717 = vmul.f32 %v710, %v715
  %719 = vrot.lane.b32.xlu0 %v717, 32
  %v720 = vpop.permute.xlu0 %719
  %v722 = vadd.f32 %v712, %v720
  %v723 = vtanh.pop %v722
  %725 = vrot.lane.b32.xlu0 %v723, 32
  %v726 = vpop.permute.xlu0 %725
  %v728 = vmul.f32 %v710, %v726
  %730 = vrot.lane.b32.xlu0 %v728, 64
  %v731 = vpop.permute.xlu0 %730
  %733 = vst.msk [vmem:[#allocation2] sm:$0xff] %vm152, %v731
  %735 = vrot.lane.b32.xlu0 %v722, 96
  %v736 = vpop.permute.xlu0 %735
  %738 = vst.msk [vmem:[#allocation3] sm:$0xff] %vm152, %v736
  // Predicated region
  $region30: #{neural_network_forward.1} parent=0 // pred_check
    %p739 = pneg %p24
  $region31: #{neural_network_forward.1} parent=0 // pred_check_branch
    %741 = sbr.rel (%p739) target = $region33
  $region32: #{neural_network_forward.1} parent=0 // pred_region
    %v742 = vpack.c.bf16 %v728, %v728
    %v743 = vld [vmem:[%s4] sm:$0xf]
    %v744 = vld [vmem:[%s4 + $0x4] sm:$0xf]
    %v745 = vld [vmem:[%s4 + $0x8] sm:$0xf]
    %v746 = vld [vmem:[%s4 + $0xc] sm:$0xf]
    %v747 = vld [vmem:[%s5] sm:$0x1]
    %v749 = vlaneseq
    %v750 = vshrl.u32 %v749, 7
    %v751 = vsub.s32 0, %v750
    %v752 = vrot.slane %v747, %v751
    %755 = vrot.lane.b32.xlu0 %v742, 64
    %v756 = vpop.permute.xlu0 %755
    %v761 = vunpack.c.l.b16 %v743
    %v762 = vunpack.c.l.b16 %v744
    %v763 = vunpack.c.l.b16 %v745
    %v764 = vunpack.c.l.b16 %v746
    %v765 = vpack.c.b16 %v762, %v761
    %v766 = vpack.c.b16 %v764, %v763
    %v770 = vsel %vm152, %v756, 0
    %772 = vmatprep.subr.bf16.mxu0 0
    %773 = vmatpush1.bf16.msra.mxu0 0
    %774 = vmatprep.subr.bf16.mxu0 0
    %775 = vmatpush1.bf16.msra.mxu0 0
    %776 = vmatprep.subr.bf16.mxu0 0
    %777 = vmatpush1.bf16.msra.mxu0 0
    %778 = vmatprep.subr.bf16.mxu0 0
    %779 = vmatpush1.bf16.msra.mxu0 0
    %780 = vmatprep.subr.bf16.mxu0 0
    %781 = vmatpush1.bf16.msra.mxu0 0
    %782 = vmatprep.subr.bf16.mxu0 0
    %783 = vmatpush1.bf16.msra.mxu0 0
    %784 = vmatprep.subr.bf16.mxu0 0
    %785 = vmatpush1.bf16.msra.mxu0 %v766
    %786 = vmatprep.subr.bf16.mxu0 0
    %787 = vmatpush1.bf16.msra.mxu0 %v765
    %788 = vmatprep.subr.bf16.mxu0 0
    %789 = vmatpush2.bf16.msra.mxu0 0
    %790 = vmatprep.subr.bf16.mxu0 0
    %791 = vmatpush2.bf16.msra.mxu0 0
    %792 = vmatprep.subr.bf16.mxu0 0
    %793 = vmatpush2.bf16.msra.mxu0 0
    %794 = vmatprep.subr.bf16.mxu0 0
    %795 = vmatpush2.bf16.msra.mxu0 0
    %796 = vmatprep.subr.bf16.mxu0 0
    %797 = vmatpush2.bf16.msra.mxu0 0
    %798 = vmatprep.subr.bf16.mxu0 0
    %799 = vmatpush2.bf16.msra.mxu0 0
    %800 = vmatprep.subr.bf16.mxu0 0
    %801 = vmatpush2.bf16.msra.mxu0 0
    %802 = vmatprep.subr.bf16.mxu0 0
    %803 = vmatpush2.bf16.msra.mxu0 0
    %804 = vmatprep.mubr.bf16.mxu0 0
    %805 = vmatmul.mubr.bf16.gmra.mxu0 %v770
    %v806 = vpop.f32.mrf.mxu0
    %v807 = vadd.f32 %v752, %v806
    %v808 = vpop.f32.mrf.mxu0
    %v809 = vpop.f32.mrf.mxu0
    %v810 = vpop.f32.mrf.mxu0
    %811 = vdwg.mxu0
    %812 = vst [vmem:[%s6] sm:$0xff] %v807
  $region33: #{neural_network_forward.1} parent=0 // pred_fallthru
    _
  // Predicated region
  $region34: #{neural_network_forward.1} parent=0 // pred_check
    _
  $region35: #{neural_network_forward.1} parent=0 // pred_check_branch
    %814 = sbr.rel (0) target = $region37
  $region36: #{neural_network_forward.1} parent=0 // pred_region
    _
  $region37: #{neural_network_forward.1} parent=0 // pred_fallthru
    _
  // Predicated region
  $region38: #{neural_network_forward.1} parent=0 // pred_check
    _
  $region39: #{neural_network_forward.1} parent=0 // pred_check_branch
    %816 = sbr.rel (0) target = $region41
  $region40: #{neural_network_forward.1} parent=0 // pred_region
    _
  $region41: #{neural_network_forward.1} parent=0 // pred_fallthru
    _

</llo_original>
